<compile_context>
chip_gen: v6e
topology: v6e:2x2x1
jax: 0.10.0
libtpu: 0.0.40
codegen_flags: <defaults>
</compile_context>

<pallas_src>
import math

import jax
import jax.numpy as jnp
from jax import lax
from jax.experimental import pallas as pl
from jax.experimental.pallas import tpu as pltpu

_MAX_TILE_ROWS = 1024    # packed rows per grid step (<= 512 KiB f32 per block)
_CHUNK_ROWS = 256        # packed rows per in-kernel chunk (bounds live vregs)
_PALLAS_MIN_ROWS = 8192  # below this many logical rows, fused XLA is faster


def _round_up(x, m):
    return -(-x // m) * m


def prepare_params(weight, bias):
    """One-time weight/bias re-layout (hoisted out of every forward call).

    PyTorch `weight` is (out_dim=1, in_dim).  Returns a weight that is either
      * (in_dim, 1)        when in_dim cannot be lane-packed, or
      * (in_dim * p, p)    block-diagonal with p = 128 // in_dim, so a free
                           contiguous reshape of the activations to
                           (R/p, in_dim*p) turns the per-row dot product into
                           a single lane-dense MXU matmul.
    Column 0 of the first in_dim rows is always the raw weight column (used by
    the fallback paths).
    """
    out_dim, in_dim = weight.shape
    assert out_dim == 1, "baseline_network regresses a scalar baseline"
    w_col = jnp.asarray(weight, jnp.float32).reshape(in_dim, 1)
    b_vec = jnp.asarray(bias, jnp.float32).reshape(1)
    if in_dim < 128 and 128 % in_dim == 0:
        p = 128 // in_dim
        eye = jnp.eye(p, dtype=jnp.float32)                        # (p, p)
        w_packed = (eye[:, None, :] * w_col[None, :, :]).reshape(p * in_dim, p)
    else:
        w_packed = w_col
    return w_packed, b_vec


def _make_head_kernel(n_chunks, chunk):
    """Kernel: o = relu(h @ Wp + b) on one (tile, k) block, chunked over rows."""

    def kernel(h_ref, w_ref, b_ref, o_ref):
        # h_ref: (tile, k) VMEM  -- activations, lane-dense when packed
        # w_ref: (k, p)    VMEM  -- resident across all grid steps
        # b_ref: (1,)      SMEM  -- scalar bias
        # o_ref: (tile, p) VMEM
        w = w_ref[...]            # hoisted out of the chunk loop (no re-load)
        bias = b_ref[0]

        def chunk_body(c, carry):
            r0 = pl.multiple_of(c * chunk, chunk)
            acc = jnp.dot(h_ref[pl.ds(r0, chunk), :], w,
                          preferred_element_type=jnp.float32,
                          precision=lax.Precision.HIGHEST)          # MXU
            o_ref[pl.ds(r0, chunk), :] = jnp.maximum(
                acc + bias, 0.0).astype(o_ref.dtype)
            return carry

        if n_chunks == 1:
            chunk_body(0, 0)
        else:
            lax.fori_loop(0, n_chunks, chunk_body, 0, unroll=True)

    return kernel


@jax.jit
def baseline_head_pallas(h_all, w_packed, b_vec):
    """relu(h @ W^T + b) over all leading dims of h_all, in one pallas_call."""
    lead = h_all.shape[:-1]
    in_dim = h_all.shape[-1]
    R = math.prod(lead)

    p = w_packed.shape[1]
    if p > 1 and R % p != 0:
        # Row count not divisible by the pack factor: use the plain column.
        w_use, p = w_packed[:in_dim, :1], 1
    else:
        w_use = w_packed
    w_use = w_use.astype(h_all.dtype)        # bf16 inputs -> bf16 MXU operands

    rows = R // p
    k_dim = in_dim * p
    h2 = h_all.reshape(rows, k_dim)          # contiguous reshape: no HBM pass

    if rows <= _MAX_TILE_ROWS:
        tile, chunk, n_chunks = rows, rows, 1
    else:
        # >= 2 grid steps whenever we tile, so v7x can split across its 2 TCs.
        tile = min(_MAX_TILE_ROWS, _round_up(-(-rows // 2), _CHUNK_ROWS))
        chunk = _CHUNK_ROWS
        n_chunks = tile // chunk
    grid = (pl.cdiv(rows, tile),)

    out = pl.pallas_call(
        _make_head_kernel(n_chunks, chunk),
        out_shape=jax.ShapeDtypeStruct((rows, p), h_all.dtype),
        grid_spec=pltpu.PrefetchScalarGridSpec(
            num_scalar_prefetch=0,
            grid=grid,
            in_specs=[
                # activations advance with the grid (natural layout, no copy)
                pl.BlockSpec((tile, k_dim), lambda i: (i, 0)),
                # packed weight: same block every step -> stays VMEM-resident
                pl.BlockSpec((k_dim, p), lambda i: (0, 0)),
                # scalar bias: SMEM, no VMEM DMA / vreg broadcast per step
                pl.BlockSpec(memory_space=pltpu.MemorySpace.SMEM),
            ],
            out_specs=pl.BlockSpec((tile, p), lambda i: (i, 0)),
        ),
        compiler_params=pltpu.CompilerParams(
            dimension_semantics=("parallel",)),
    )(h2, w_use, b_vec)

    return out.reshape(lead + (1,))


def _baseline_head_xla(h_all, w_packed, b_vec):
    """Plain fused-XLA path for tiny workloads (dispatch overhead dominates)."""
    in_dim = h_all.shape[-1]
    w_col = w_packed[:in_dim, :1]
    y = jnp.einsum("...i,io->...o", h_all, w_col,
                   precision=lax.Precision.HIGHEST) + b_vec
    return jnp.maximum(y, 0.0).astype(h_all.dtype)


@jax.jit
def baseline_network_forward_fused(h_all, w_packed, b_vec):
    """Baseline head over any leading dims, e.g. (T, B, in) -> (T, B, 1)."""
    h_all = lax.stop_gradient(h_all)         # h_t.detach(): forward-identical
    if math.prod(h_all.shape[:-1]) < _PALLAS_MIN_ROWS:
        # Tiny op: a standalone pallas_call costs more than the math; let XLA
        # fuse it into the surrounding graph (e.g. the RNN step producing h_t).
        return _baseline_head_xla(h_all, w_packed, b_vec)
    return baseline_head_pallas(h_all, w_packed, b_vec)


def baseline_network_forward(h_t, w_packed, b_vec):
    """Single-timestep API matching the PyTorch module: (B, in) -> (B, 1)."""
    return baseline_network_forward_fused(h_t, w_packed, b_vec)


if __name__ == "__main__":
    key = jax.random.PRNGKey(0)
    k_h, k_w, k_b, k_h2 = jax.random.split(key, 4)

    input_size, output_size = 32, 1

    # nn.Linear default init: uniform +-1/sqrt(fan_in).
    bound = 1.0 / math.sqrt(input_size)
    weight = jax.random.uniform(
        k_w, (output_size, input_size), jnp.float32, -bound, bound)
    bias = jax.random.uniform(
        k_b, (output_size,), jnp.float32, -bound, bound)
    w_packed, b_vec = prepare_params(weight, bias)

    def ref_fn(h):
        return jnp.maximum(
            jnp.einsum("...i,oi->...o", h, weight,
                       precision=lax.Precision.HIGHEST) + bias, 0.0)

    # 1) Small demo shape: Pallas kernel called directly (single lane-dense block).
    T, B = 16, 8
    h_small = jax.random.normal(k_h, (T, B, input_size), jnp.float32)
    out_small = jax.block_until_ready(baseline_head_pallas(h_small, w_packed, b_vec))
    assert out_small.shape == (T, B, output_size)
    assert jnp.allclose(out_small, ref_fn(h_small), atol=1e-4, rtol=1e-4)

    # 2) Larger fused workload: tiled grid (2 steps) + chunked kernel body, f32.
    T2, B2 = 128, 64          # R = 8192 rows -> 2048 packed rows -> grid of 2
    h_big = jax.random.normal(k_h2, (T2, B2, input_size), jnp.float32)
    out_big = jax.block_until_ready(
        baseline_network_forward_fused(h_big, w_packed, b_vec))
    assert out_big.shape == (T2, B2, output_size)
    assert jnp.allclose(out_big, ref_fn(h_big), atol=1e-4, rtol=1e-4)

    # 3) bf16 hidden states (halves HBM reads on v6e/v7x), f32 accumulation.
    out_bf16 = jax.block_until_ready(
        baseline_head_pallas(h_big.astype(jnp.bfloat16), w_packed, b_vec))
    assert out_bf16.dtype == jnp.bfloat16
    ref_bf16 = ref_fn(h_big.astype(jnp.bfloat16).astype(jnp.float32))
    assert jnp.allclose(out_bf16.astype(jnp.float32), ref_bf16,
                        atol=5e-2, rtol=5e-2)

    # 4) Per-step API matching the PyTorch forward signature (tiny -> XLA path).
    out_step = jax.block_until_ready(
        baseline_network_forward(h_small[0], w_packed, b_vec))
    assert out_step.shape == (B, output_size)
    assert jnp.allclose(out_step, ref_fn(h_small[0]), atol=1e-4, rtol=1e-4)

    print("KERNEL_OK")
</pallas_src>

<mosaic_0001>
module attributes {stable_mosaic.version = 11 : i64} {
  func.func @kernel(%arg0: i32, %arg1: memref<32x128xf32, #tpu.memory_space<vmem>>, %arg2: memref<128x4xf32, #tpu.memory_space<vmem>>, %arg3: memref<1xf32, #tpu.memory_space<smem>>, %arg4: memref<32x4xf32, #tpu.memory_space<vmem>>) attributes {dimension_semantics = [#tpu.dimension_semantics<parallel>], iteration_bounds = array<i64: 1>, scalar_prefetch = 0 : i64, scratch_operands = 0 : i64, tpu.core_type = #tpu.core_type<tc>, window_params = [{transform_indices = @transform_0, window_bounds = array<i64: 32, 128>}, {pipeline_mode = #tpu.pipeline_mode<synchronous>, transform_indices = @transform_1, window_bounds = array<i64: 128, 4>}, {transform_indices = @transform_2, window_bounds = array<i64: 1>}, {transform_indices = @transform_3, window_bounds = array<i64: 32, 4>}]} {
    %c0 = arith.constant 0 : index
    %c0_0 = arith.constant 0 : index
    %0 = vector.load %arg2[%c0, %c0_0] : memref<128x4xf32, #tpu.memory_space<vmem>>, vector<128x4xf32>
    %c0_1 = arith.constant 0 : index
    %1 = memref.load %arg3[%c0_1] : memref<1xf32, #tpu.memory_space<smem>>
    %c0_i32 = arith.constant 0 : i32
    %2 = tpu.assume_multiple %c0_i32, 32 : i32
    %3 = arith.index_cast %2 : i32 to index
    %c0_2 = arith.constant 0 : index
    %4 = vector.load %arg1[%3, %c0_2] : memref<32x128xf32, #tpu.memory_space<vmem>>, vector<32x128xf32>
    %cst = arith.constant dense<0.000000e+00> : vector<32x4xf32>
    %5 = tpu.matmul %4, %0, %cst {dimension_numbers = #tpu.dot_dimension_numbers<[1], [0], [0], [1], [0, 0, 1, 1], [], []>, precision = #tpu.contract_precision<fp32>} : vector<32x128xf32>, vector<128x4xf32>, vector<32x4xf32> -> vector<32x4xf32>
    %6 = vector.broadcast %1 : f32 to vector<32x4xf32>
    %7 = arith.addf %5, %6 : vector<32x4xf32>
    %cst_3 = arith.constant 0.000000e+00 : f32
    %8 = vector.broadcast %cst_3 : f32 to vector<32x4xf32>
    %9 = arith.maximumf %7, %8 : vector<32x4xf32>
    %10 = arith.index_cast %2 : i32 to index
    %c0_4 = arith.constant 0 : index
    %11 = vector.load %arg4[%10, %c0_4] : memref<32x4xf32, #tpu.memory_space<vmem>>, vector<32x4xf32>
    tpu.vector_store %arg4[%10, %c0_4], %9 {strides = array<i32>} : memref<32x4xf32, #tpu.memory_space<vmem>>, vector<32x4xf32>,
    return
  }
  func.func @transform_0(%arg0: i32) -> (i32, i32) {
    %c0_i32 = arith.constant 0 : i32
    %c0_i32_0 = arith.constant 0 : i32
    return %arg0, %c0_i32 : i32, i32
  }
  func.func @transform_1(%arg0: i32) -> (i32, i32) {
    %c0_i32 = arith.constant 0 : i32
    %c0_i32_0 = arith.constant 0 : i32
    %c0_i32_1 = arith.constant 0 : i32
    return %c0_i32, %c0_i32_0 : i32, i32
  }
  func.func @transform_2(%arg0: i32) -> i32 {
    %c0_i32 = arith.constant 0 : i32
    %c0_i32_0 = arith.constant 0 : i32
    return %c0_i32 : i32
  }
  func.func @transform_3(%arg0: i32) -> (i32, i32) {
    %c0_i32 = arith.constant 0 : i32
    %c0_i32_0 = arith.constant 0 : i32
    return %arg0, %c0_i32 : i32, i32
  }
}

</mosaic_0001>

<llo_original>
// kernel: baseline_head_pallas.1
$region0: #{baseline_head_pallas.1}
  #allocation0 [shape = 'u32[]', space=smem, size = 0x4, offset = 0x4, fixed_abs, tag = 'smem constant byte address 0x4 - core index']
  #allocation1 [shape = 'u32[144,128]{1,0:T(1,128)}', space=vmem, size = 0x12000, scoped, tag = 'internal scratch']
  #allocation2 [shape = 'f32[1]{0:T(128)S(6)}', space=smem, size = 0x200, scoped, tag = 'scoped memory for baseline_head_pallas.1']
  %s0 = inlined_call_operand.vmem [shape: f32[32,128], index: 0, kind: input, shape index: {}]
  %s1 = inlined_call_operand.vmem [shape: f32[128,4], index: 1, kind: input, shape index: {}]
  %s2 = inlined_call_operand.<no memory space> [shape: f32[1], index: 2, kind: input, shape index: {}]
  %s3 = inlined_call_operand.vmem [shape: f32[32,4], index: 3, kind: output, shape index: {}]
  %s4 = sld [smem:[#allocation0]]
  $region22: #{baseline_head_pallas.1} parent=0
    _
  %s6 = ssub.s32 1, %s4
  %s7 = scalar_select 0, %s6, %s4
  %8 = sst [smem:[#allocation2]] %s2
  // Predicated region
  $region2: #{baseline_head_pallas.1} parent=0 // pred_check
    _
  $region3: #{baseline_head_pallas.1} parent=0 // pred_check_branch
    %10 = sbr.rel (0) target = $region5
  $region4: #{baseline_head_pallas.1} parent=0 // pred_region
    _
  $region5: #{baseline_head_pallas.1} parent=0 // pred_fallthru
    _
  // Predicated region
  $region6: #{baseline_head_pallas.1} parent=0 // pred_check
    _
  $region7: #{baseline_head_pallas.1} parent=0 // pred_check_branch
    %12 = sbr.rel (0) target = $region9
  $region8: #{baseline_head_pallas.1} parent=0 // pred_region
    _
  $region9: #{baseline_head_pallas.1} parent=0 // pred_fallthru
    _
  // Predicated region
  $region10: #{baseline_head_pallas.1} parent=0 // pred_check
    _
  $region11: #{baseline_head_pallas.1} parent=0 // pred_check_branch
    %14 = sbr.rel (0) target = $region13
  $region12: #{baseline_head_pallas.1} parent=0 // pred_region
    _
  $region13: #{baseline_head_pallas.1} parent=0 // pred_fallthru
    _
  %v15 = vld [vmem:[%s1] sm:$0xff]
  %v16 = vld [vmem:[%s1 + $0x8] sm:$0xff]
  %v17 = vld [vmem:[%s1 + $0x10] sm:$0xff]
  %v18 = vld [vmem:[%s1 + $0x18] sm:$0xff]
  %v19 = vld [vmem:[%s1 + $0x20] sm:$0xff]
  %v20 = vld [vmem:[%s1 + $0x28] sm:$0xff]
  %v21 = vld [vmem:[%s1 + $0x30] sm:$0xff]
  %v22 = vld [vmem:[%s1 + $0x38] sm:$0xff]
  %v23 = vld [vmem:[%s1 + $0x40] sm:$0xff]
  %v24 = vld [vmem:[%s1 + $0x48] sm:$0xff]
  %v25 = vld [vmem:[%s1 + $0x50] sm:$0xff]
  %v26 = vld [vmem:[%s1 + $0x58] sm:$0xff]
  %v27 = vld [vmem:[%s1 + $0x60] sm:$0xff]
  %v28 = vld [vmem:[%s1 + $0x68] sm:$0xff]
  %v29 = vld [vmem:[%s1 + $0x70] sm:$0xff]
  %v30 = vld [vmem:[%s1 + $0x78] sm:$0xff]
  %s31 = sld [smem:[#allocation2]]
  %v32 = vld [vmem:[%s0] sm:$0xff]
  %v33 = vld [vmem:[%s0 + $0x8] sm:$0xff]
  %v34 = vld [vmem:[%s0 + $0x10] sm:$0xff]
  %v35 = vld [vmem:[%s0 + $0x18] sm:$0xff]
  %v36 = vstv %s31
  %37 = vmatprep.subr.mxu0 0.0
  %v38 = vand.u32 %v30, 4294901760
  %39 = vmatpush1.msra.mxu0 %v38
  %40 = vmatprep.subr.mxu0 0.0
  %v41 = vand.u32 %v29, 4294901760
  %42 = vmatpush1.msra.mxu0 %v41
  %43 = vmatprep.subr.mxu0 0.0
  %v44 = vand.u32 %v28, 4294901760
  %45 = vmatpush1.msra.mxu0 %v44
  %46 = vmatprep.subr.mxu0 0.0
  %v47 = vand.u32 %v27, 4294901760
  %48 = vmatpush1.msra.mxu0 %v47
  %49 = vmatprep.subr.mxu0 0.0
  %v50 = vand.u32 %v26, 4294901760
  %51 = vmatpush1.msra.mxu0 %v50
  %52 = vmatprep.subr.mxu0 0.0
  %v53 = vand.u32 %v25, 4294901760
  %54 = vmatpush1.msra.mxu0 %v53
  %55 = vmatprep.subr.mxu0 0.0
  %v56 = vand.u32 %v24, 4294901760
  %57 = vmatpush1.msra.mxu0 %v56
  %58 = vmatprep.subr.mxu0 0.0
  %v59 = vand.u32 %v23, 4294901760
  %60 = vmatpush1.msra.mxu0 %v59
  %61 = vmatprep.subr.mxu0 0.0
  %v62 = vand.u32 %v22, 4294901760
  %63 = vmatpush1.msra.mxu0 %v62
  %64 = vmatprep.subr.mxu0 0.0
  %v65 = vand.u32 %v21, 4294901760
  %66 = vmatpush1.msra.mxu0 %v65
  %67 = vmatprep.subr.mxu0 0.0
  %v68 = vand.u32 %v20, 4294901760
  %69 = vmatpush1.msra.mxu0 %v68
  %70 = vmatprep.subr.mxu0 0.0
  %v71 = vand.u32 %v19, 4294901760
  %72 = vmatpush1.msra.mxu0 %v71
  %73 = vmatprep.subr.mxu0 0.0
  %v74 = vand.u32 %v18, 4294901760
  %75 = vmatpush1.msra.mxu0 %v74
  %76 = vmatprep.subr.mxu0 0.0
  %v77 = vand.u32 %v17, 4294901760
  %78 = vmatpush1.msra.mxu0 %v77
  %79 = vmatprep.subr.mxu0 0.0
  %v80 = vand.u32 %v16, 4294901760
  %81 = vmatpush1.msra.mxu0 %v80
  %82 = vmatprep.subr.mxu0 0.0
  %v83 = vand.u32 %v15, 4294901760
  %84 = vmatpush1.msra.mxu0 %v83
  %85 = vmatprep.subr.mxu0 0.0
  %86 = vmatpush2.msra.mxu0 0.0
  %87 = vmatprep.subr.mxu0 0.0
  %88 = vmatpush2.msra.mxu0 0.0
  %89 = vmatprep.subr.mxu0 0.0
  %90 = vmatpush2.msra.mxu0 0.0
  %91 = vmatprep.subr.mxu0 0.0
  %92 = vmatpush2.msra.mxu0 0.0
  %93 = vmatprep.subr.mxu0 0.0
  %94 = vmatpush2.msra.mxu0 0.0
  %95 = vmatprep.subr.mxu0 0.0
  %96 = vmatpush2.msra.mxu0 0.0
  %97 = vmatprep.subr.mxu0 0.0
  %98 = vmatpush2.msra.mxu0 0.0
  %99 = vmatprep.subr.mxu0 0.0
  %100 = vmatpush2.msra.mxu0 0.0
  %101 = vmatprep.subr.mxu0 0.0
  %102 = vmatpush2.msra.mxu0 0.0
  %103 = vmatprep.subr.mxu0 0.0
  %104 = vmatpush2.msra.mxu0 0.0
  %105 = vmatprep.subr.mxu0 0.0
  %106 = vmatpush2.msra.mxu0 0.0
  %107 = vmatprep.subr.mxu0 0.0
  %108 = vmatpush2.msra.mxu0 0.0
  %109 = vmatprep.subr.mxu0 0.0
  %110 = vmatpush2.msra.mxu0 0.0
  %111 = vmatprep.subr.mxu0 0.0
  %112 = vmatpush2.msra.mxu0 0.0
  %113 = vmatprep.subr.mxu0 0.0
  %114 = vmatpush2.msra.mxu0 0.0
  %115 = vmatprep.subr.mxu0 0.0
  %116 = vmatpush2.msra.mxu0 0.0
  %117 = vmatprep.mubr.f32.mxu0 0.0
  %v118 = vand.u32 %v32, 4294901760
  %v119 = vsub.f32 %v32, %v118
  %v120 = vand.u32 %v119, 4294901760
  %v121 = vsub.f32 %v119, %v120
  %v122 = vand.u32 %v121, 4294901760
  %123 = vmatmul.mubr.f32.gmra.mxu0 %v122
  %v124 = vpop.f32.mrf.mxu0
  %v125 = vadd.f32 %v36, %v124
  %v126 = vpop.f32.mrf.mxu0
  %127 = vmatprep.mubr.f32.mxu0 0.0
  %v128 = vand.u32 %v33, 4294901760
  %v129 = vsub.f32 %v33, %v128
  %v130 = vand.u32 %v129, 4294901760
  %v131 = vsub.f32 %v129, %v130
  %v132 = vand.u32 %v131, 4294901760
  %133 = vmatmul.mubr.f32.gmra.mxu0 %v132
  %v134 = vpop.f32.mrf.mxu0
  %v135 = vadd.f32 %v36, %v134
  %v136 = vpop.f32.mrf.mxu0
  %137 = vmatprep.mubr.f32.mxu0 0.0
  %v138 = vand.u32 %v34, 4294901760
  %v139 = vsub.f32 %v34, %v138
  %v140 = vand.u32 %v139, 4294901760
  %v141 = vsub.f32 %v139, %v140
  %v142 = vand.u32 %v141, 4294901760
  %143 = vmatmul.mubr.f32.gmra.mxu0 %v142
  %v144 = vpop.f32.mrf.mxu0
  %v145 = vadd.f32 %v36, %v144
  %v146 = vpop.f32.mrf.mxu0
  %147 = vmatprep.mubr.f32.mxu0 0.0
  %v148 = vand.u32 %v35, 4294901760
  %v149 = vsub.f32 %v35, %v148
  %v150 = vand.u32 %v149, 4294901760
  %v151 = vsub.f32 %v149, %v150
  %v152 = vand.u32 %v151, 4294901760
  %153 = vmatmul.mubr.f32.gmra.mxu0 %v152
  %v154 = vpop.f32.mrf.mxu0
  %v155 = vadd.f32 %v36, %v154
  %v156 = vpop.f32.mrf.mxu0
  %157 = vdwg.mxu0
  %158 = vmatprep.subr.mxu0 0.0
  %v159 = vand.u32 %v30, 4294901760
  %v160 = vsub.f32 %v30, %v159
  %v161 = vand.u32 %v160, 4294901760
  %v162 = vsub.f32 %v160, %v161
  %v163 = vand.u32 %v162, 4294901760
  %164 = vmatpush1.msra.mxu0 %v163
  %165 = vmatprep.subr.mxu0 0.0
  %v166 = vand.u32 %v29, 4294901760
  %v167 = vsub.f32 %v29, %v166
  %v168 = vand.u32 %v167, 4294901760
  %v169 = vsub.f32 %v167, %v168
  %v170 = vand.u32 %v169, 4294901760
  %171 = vmatpush1.msra.mxu0 %v170
  %172 = vmatprep.subr.mxu0 0.0
  %v173 = vand.u32 %v28, 4294901760
  %v174 = vsub.f32 %v28, %v173
  %v175 = vand.u32 %v174, 4294901760
  %v176 = vsub.f32 %v174, %v175
  %v177 = vand.u32 %v176, 4294901760
  %178 = vmatpush1.msra.mxu0 %v177
  %179 = vmatprep.subr.mxu0 0.0
  %v180 = vand.u32 %v27, 4294901760
  %v181 = vsub.f32 %v27, %v180
  %v182 = vand.u32 %v181, 4294901760
  %v183 = vsub.f32 %v181, %v182
  %v184 = vand.u32 %v183, 4294901760
  %185 = vmatpush1.msra.mxu0 %v184
  %186 = vmatprep.subr.mxu0 0.0
  %v187 = vand.u32 %v26, 4294901760
  %v188 = vsub.f32 %v26, %v187
  %v189 = vand.u32 %v188, 4294901760
  %v190 = vsub.f32 %v188, %v189
  %v191 = vand.u32 %v190, 4294901760
  %192 = vmatpush1.msra.mxu0 %v191
  %193 = vmatprep.subr.mxu0 0.0
  %v194 = vand.u32 %v25, 4294901760
  %v195 = vsub.f32 %v25, %v194
  %v196 = vand.u32 %v195, 4294901760
  %v197 = vsub.f32 %v195, %v196
  %v198 = vand.u32 %v197, 4294901760
  %199 = vmatpush1.msra.mxu0 %v198
  %200 = vmatprep.subr.mxu0 0.0
  %v201 = vand.u32 %v24, 4294901760
  %v202 = vsub.f32 %v24, %v201
  %v203 = vand.u32 %v202, 4294901760
  %v204 = vsub.f32 %v202, %v203
  %v205 = vand.u32 %v204, 4294901760
  %206 = vmatpush1.msra.mxu0 %v205
  %207 = vmatprep.subr.mxu0 0.0
  %v208 = vand.u32 %v23, 4294901760
  %v209 = vsub.f32 %v23, %v208
  %v210 = vand.u32 %v209, 4294901760
  %v211 = vsub.f32 %v209, %v210
  %v212 = vand.u32 %v211, 4294901760
  %213 = vmatpush1.msra.mxu0 %v212
  %214 = vmatprep.subr.mxu0 0.0
  %v215 = vand.u32 %v22, 4294901760
  %v216 = vsub.f32 %v22, %v215
  %v217 = vand.u32 %v216, 4294901760
  %v218 = vsub.f32 %v216, %v217
  %v219 = vand.u32 %v218, 4294901760
  %220 = vmatpush1.msra.mxu0 %v219
  %221 = vmatprep.subr.mxu0 0.0
  %v222 = vand.u32 %v21, 4294901760
  %v223 = vsub.f32 %v21, %v222
  %v224 = vand.u32 %v223, 4294901760
  %v225 = vsub.f32 %v223, %v224
  %v226 = vand.u32 %v225, 4294901760
  %227 = vmatpush1.msra.mxu0 %v226
  %228 = vmatprep.subr.mxu0 0.0
  %v229 = vand.u32 %v20, 4294901760
  %v230 = vsub.f32 %v20, %v229
  %v231 = vand.u32 %v230, 4294901760
  %v232 = vsub.f32 %v230, %v231
  %v233 = vand.u32 %v232, 4294901760
  %234 = vmatpush1.msra.mxu0 %v233
  %235 = vmatprep.subr.mxu0 0.0
  %v236 = vand.u32 %v19, 4294901760
  %v237 = vsub.f32 %v19, %v236
  %v238 = vand.u32 %v237, 4294901760
  %v239 = vsub.f32 %v237, %v238
  %v240 = vand.u32 %v239, 4294901760
  %241 = vmatpush1.msra.mxu0 %v240
  %242 = vmatprep.subr.mxu0 0.0
  %v243 = vand.u32 %v18, 4294901760
  %v244 = vsub.f32 %v18, %v243
  %v245 = vand.u32 %v244, 4294901760
  %v246 = vsub.f32 %v244, %v245
  %v247 = vand.u32 %v246, 4294901760
  %248 = vmatpush1.msra.mxu0 %v247
  %249 = vmatprep.subr.mxu0 0.0
  %v250 = vand.u32 %v17, 4294901760
  %v251 = vsub.f32 %v17, %v250
  %v252 = vand.u32 %v251, 4294901760
  %v253 = vsub.f32 %v251, %v252
  %v254 = vand.u32 %v253, 4294901760
  %255 = vmatpush1.msra.mxu0 %v254
  %256 = vmatprep.subr.mxu0 0.0
  %v257 = vand.u32 %v16, 4294901760
  %v258 = vsub.f32 %v16, %v257
  %v259 = vand.u32 %v258, 4294901760
  %v260 = vsub.f32 %v258, %v259
  %v261 = vand.u32 %v260, 4294901760
  %262 = vmatpush1.msra.mxu0 %v261
  %263 = vmatprep.subr.mxu0 0.0
  %v264 = vand.u32 %v15, 4294901760
  %v265 = vsub.f32 %v15, %v264
  %v266 = vand.u32 %v265, 4294901760
  %v267 = vsub.f32 %v265, %v266
  %v268 = vand.u32 %v267, 4294901760
  %269 = vmatpush1.msra.mxu0 %v268
  %270 = vmatprep.subr.mxu0 0.0
  %271 = vmatpush2.msra.mxu0 0.0
  %272 = vmatprep.subr.mxu0 0.0
  %273 = vmatpush2.msra.mxu0 0.0
  %274 = vmatprep.subr.mxu0 0.0
  %275 = vmatpush2.msra.mxu0 0.0
  %276 = vmatprep.subr.mxu0 0.0
  %277 = vmatpush2.msra.mxu0 0.0
  %278 = vmatprep.subr.mxu0 0.0
  %279 = vmatpush2.msra.mxu0 0.0
  %280 = vmatprep.subr.mxu0 0.0
  %281 = vmatpush2.msra.mxu0 0.0
  %282 = vmatprep.subr.mxu0 0.0
  %283 = vmatpush2.msra.mxu0 0.0
  %284 = vmatprep.subr.mxu0 0.0
  %285 = vmatpush2.msra.mxu0 0.0
  %286 = vmatprep.subr.mxu0 0.0
  %287 = vmatpush2.msra.mxu0 0.0
  %288 = vmatprep.subr.mxu0 0.0
  %289 = vmatpush2.msra.mxu0 0.0
  %290 = vmatprep.subr.mxu0 0.0
  %291 = vmatpush2.msra.mxu0 0.0
  %292 = vmatprep.subr.mxu0 0.0
  %293 = vmatpush2.msra.mxu0 0.0
  %294 = vmatprep.subr.mxu0 0.0
  %295 = vmatpush2.msra.mxu0 0.0
  %296 = vmatprep.subr.mxu0 0.0
  %297 = vmatpush2.msra.mxu0 0.0
  %298 = vmatprep.subr.mxu0 0.0
  %299 = vmatpush2.msra.mxu0 0.0
  %300 = vmatprep.subr.mxu0 0.0
  %301 = vmatpush2.msra.mxu0 0.0
  %302 = vmatprep.mubr.f32.mxu0 0.0
  %v303 = vand.u32 %v32, 4294901760
  %304 = vmatmul.mubr.f32.gmra.mxu0 %v303
  %v305 = vpop.f32.mrf.mxu0
  %v306 = vadd.f32 %v125, %v305
  %v307 = vpop.f32.mrf.mxu0
  %308 = vmatprep.mubr.f32.mxu0 0.0
  %v309 = vand.u32 %v33, 4294901760
  %310 = vmatmul.mubr.f32.gmra.mxu0 %v309
  %v311 = vpop.f32.mrf.mxu0
  %v312 = vadd.f32 %v135, %v311
  %v313 = vpop.f32.mrf.mxu0
  %314 = vmatprep.mubr.f32.mxu0 0.0
  %v315 = vand.u32 %v34, 4294901760
  %316 = vmatmul.mubr.f32.gmra.mxu0 %v315
  %v317 = vpop.f32.mrf.mxu0
  %v318 = vadd.f32 %v145, %v317
  %v319 = vpop.f32.mrf.mxu0
  %320 = vmatprep.mubr.f32.mxu0 0.0
  %v321 = vand.u32 %v35, 4294901760
  %322 = vmatmul.mubr.f32.gmra.mxu0 %v321
  %v323 = vpop.f32.mrf.mxu0
  %v324 = vadd.f32 %v155, %v323
  %v325 = vpop.f32.mrf.mxu0
  %326 = vdwg.mxu0
  %327 = vmatprep.subr.mxu0 0.0
  %v328 = vand.u32 %v30, 4294901760
  %v329 = vsub.f32 %v30, %v328
  %330 = vmatpush1.msra.mxu0 %v329
  %331 = vmatprep.subr.mxu0 0.0
  %v332 = vand.u32 %v29, 4294901760
  %v333 = vsub.f32 %v29, %v332
  %334 = vmatpush1.msra.mxu0 %v333
  %335 = vmatprep.subr.mxu0 0.0
  %v336 = vand.u32 %v28, 4294901760
  %v337 = vsub.f32 %v28, %v336
  %338 = vmatpush1.msra.mxu0 %v337
  %339 = vmatprep.subr.mxu0 0.0
  %v340 = vand.u32 %v27, 4294901760
  %v341 = vsub.f32 %v27, %v340
  %342 = vmatpush1.msra.mxu0 %v341
  %343 = vmatprep.subr.mxu0 0.0
  %v344 = vand.u32 %v26, 4294901760
  %v345 = vsub.f32 %v26, %v344
  %346 = vmatpush1.msra.mxu0 %v345
  %347 = vmatprep.subr.mxu0 0.0
  %v348 = vand.u32 %v25, 4294901760
  %v349 = vsub.f32 %v25, %v348
  %350 = vmatpush1.msra.mxu0 %v349
  %351 = vmatprep.subr.mxu0 0.0
  %v352 = vand.u32 %v24, 4294901760
  %v353 = vsub.f32 %v24, %v352
  %354 = vmatpush1.msra.mxu0 %v353
  %355 = vmatprep.subr.mxu0 0.0
  %v356 = vand.u32 %v23, 4294901760
  %v357 = vsub.f32 %v23, %v356
  %358 = vmatpush1.msra.mxu0 %v357
  %359 = vmatprep.subr.mxu0 0.0
  %v360 = vand.u32 %v22, 4294901760
  %v361 = vsub.f32 %v22, %v360
  %362 = vmatpush1.msra.mxu0 %v361
  %363 = vmatprep.subr.mxu0 0.0
  %v364 = vand.u32 %v21, 4294901760
  %v365 = vsub.f32 %v21, %v364
  %366 = vmatpush1.msra.mxu0 %v365
  %367 = vmatprep.subr.mxu0 0.0
  %v368 = vand.u32 %v20, 4294901760
  %v369 = vsub.f32 %v20, %v368
  %370 = vmatpush1.msra.mxu0 %v369
  %371 = vmatprep.subr.mxu0 0.0
  %v372 = vand.u32 %v19, 4294901760
  %v373 = vsub.f32 %v19, %v372
  %374 = vmatpush1.msra.mxu0 %v373
  %375 = vmatprep.subr.mxu0 0.0
  %v376 = vand.u32 %v18, 4294901760
  %v377 = vsub.f32 %v18, %v376
  %378 = vmatpush1.msra.mxu0 %v377
  %379 = vmatprep.subr.mxu0 0.0
  %v380 = vand.u32 %v17, 4294901760
  %v381 = vsub.f32 %v17, %v380
  %382 = vmatpush1.msra.mxu0 %v381
  %383 = vmatprep.subr.mxu0 0.0
  %v384 = vand.u32 %v16, 4294901760
  %v385 = vsub.f32 %v16, %v384
  %386 = vmatpush1.msra.mxu0 %v385
  %387 = vmatprep.subr.mxu0 0.0
  %v388 = vand.u32 %v15, 4294901760
  %v389 = vsub.f32 %v15, %v388
  %390 = vmatpush1.msra.mxu0 %v389
  %391 = vmatprep.subr.mxu0 0.0
  %392 = vmatpush2.msra.mxu0 0.0
  %393 = vmatprep.subr.mxu0 0.0
  %394 = vmatpush2.msra.mxu0 0.0
  %395 = vmatprep.subr.mxu0 0.0
  %396 = vmatpush2.msra.mxu0 0.0
  %397 = vmatprep.subr.mxu0 0.0
  %398 = vmatpush2.msra.mxu0 0.0
  %399 = vmatprep.subr.mxu0 0.0
  %400 = vmatpush2.msra.mxu0 0.0
  %401 = vmatprep.subr.mxu0 0.0
  %402 = vmatpush2.msra.mxu0 0.0
  %403 = vmatprep.subr.mxu0 0.0
  %404 = vmatpush2.msra.mxu0 0.0
  %405 = vmatprep.subr.mxu0 0.0
  %406 = vmatpush2.msra.mxu0 0.0
  %407 = vmatprep.subr.mxu0 0.0
  %408 = vmatpush2.msra.mxu0 0.0
  %409 = vmatprep.subr.mxu0 0.0
  %410 = vmatpush2.msra.mxu0 0.0
  %411 = vmatprep.subr.mxu0 0.0
  %412 = vmatpush2.msra.mxu0 0.0
  %413 = vmatprep.subr.mxu0 0.0
  %414 = vmatpush2.msra.mxu0 0.0
  %415 = vmatprep.subr.mxu0 0.0
  %416 = vmatpush2.msra.mxu0 0.0
  %417 = vmatprep.subr.mxu0 0.0
  %418 = vmatpush2.msra.mxu0 0.0
  %419 = vmatprep.subr.mxu0 0.0
  %420 = vmatpush2.msra.mxu0 0.0
  %421 = vmatprep.subr.mxu0 0.0
  %422 = vmatpush2.msra.mxu0 0.0
  %423 = vmatprep.mubr.f32.mxu0 0.0
  %v424 = vand.u32 %v32, 4294901760
  %v425 = vsub.f32 %v32, %v424
  %426 = vmatmul.mubr.f32.gmra.mxu0 %v425
  %v427 = vpop.f32.mrf.mxu0
  %v428 = vadd.f32 %v306, %v427
  %v429 = vpop.f32.mrf.mxu0
  %430 = vmatprep.mubr.f32.mxu0 0.0
  %v431 = vand.u32 %v33, 4294901760
  %v432 = vsub.f32 %v33, %v431
  %433 = vmatmul.mubr.f32.gmra.mxu0 %v432
  %v434 = vpop.f32.mrf.mxu0
  %v435 = vadd.f32 %v312, %v434
  %v436 = vpop.f32.mrf.mxu0
  %437 = vmatprep.mubr.f32.mxu0 0.0
  %v438 = vand.u32 %v34, 4294901760
  %v439 = vsub.f32 %v34, %v438
  %440 = vmatmul.mubr.f32.gmra.mxu0 %v439
  %v441 = vpop.f32.mrf.mxu0
  %v442 = vadd.f32 %v318, %v441
  %v443 = vpop.f32.mrf.mxu0
  %444 = vmatprep.mubr.f32.mxu0 0.0
  %v445 = vand.u32 %v35, 4294901760
  %v446 = vsub.f32 %v35, %v445
  %447 = vmatmul.mubr.f32.gmra.mxu0 %v446
  %v448 = vpop.f32.mrf.mxu0
  %v449 = vadd.f32 %v324, %v448
  %v450 = vpop.f32.mrf.mxu0
  %451 = vdwg.mxu0
  %452 = vmatprep.subr.mxu0 0.0
  %v453 = vand.u32 %v30, 4294901760
  %454 = vmatpush1.msra.mxu0 %v453
  %455 = vmatprep.subr.mxu0 0.0
  %v456 = vand.u32 %v29, 4294901760
  %457 = vmatpush1.msra.mxu0 %v456
  %458 = vmatprep.subr.mxu0 0.0
  %v459 = vand.u32 %v28, 4294901760
  %460 = vmatpush1.msra.mxu0 %v459
  %461 = vmatprep.subr.mxu0 0.0
  %v462 = vand.u32 %v27, 4294901760
  %463 = vmatpush1.msra.mxu0 %v462
  %464 = vmatprep.subr.mxu0 0.0
  %v465 = vand.u32 %v26, 4294901760
  %466 = vmatpush1.msra.mxu0 %v465
  %467 = vmatprep.subr.mxu0 0.0
  %v468 = vand.u32 %v25, 4294901760
  %469 = vmatpush1.msra.mxu0 %v468
  %470 = vmatprep.subr.mxu0 0.0
  %v471 = vand.u32 %v24, 4294901760
  %472 = vmatpush1.msra.mxu0 %v471
  %473 = vmatprep.subr.mxu0 0.0
  %v474 = vand.u32 %v23, 4294901760
  %475 = vmatpush1.msra.mxu0 %v474
  %476 = vmatprep.subr.mxu0 0.0
  %v477 = vand.u32 %v22, 4294901760
  %478 = vmatpush1.msra.mxu0 %v477
  %479 = vmatprep.subr.mxu0 0.0
  %v480 = vand.u32 %v21, 4294901760
  %481 = vmatpush1.msra.mxu0 %v480
  %482 = vmatprep.subr.mxu0 0.0
  %v483 = vand.u32 %v20, 4294901760
  %484 = vmatpush1.msra.mxu0 %v483
  %485 = vmatprep.subr.mxu0 0.0
  %v486 = vand.u32 %v19, 4294901760
  %487 = vmatpush1.msra.mxu0 %v486
  %488 = vmatprep.subr.mxu0 0.0
  %v489 = vand.u32 %v18, 4294901760
  %490 = vmatpush1.msra.mxu0 %v489
  %491 = vmatprep.subr.mxu0 0.0
  %v492 = vand.u32 %v17, 4294901760
  %493 = vmatpush1.msra.mxu0 %v492
  %494 = vmatprep.subr.mxu0 0.0
  %v495 = vand.u32 %v16, 4294901760
  %496 = vmatpush1.msra.mxu0 %v495
  %497 = vmatprep.subr.mxu0 0.0
  %v498 = vand.u32 %v15, 4294901760
  %499 = vmatpush1.msra.mxu0 %v498
  %500 = vmatprep.subr.mxu0 0.0
  %501 = vmatpush2.msra.mxu0 0.0
  %502 = vmatprep.subr.mxu0 0.0
  %503 = vmatpush2.msra.mxu0 0.0
  %504 = vmatprep.subr.mxu0 0.0
  %505 = vmatpush2.msra.mxu0 0.0
  %506 = vmatprep.subr.mxu0 0.0
  %507 = vmatpush2.msra.mxu0 0.0
  %508 = vmatprep.subr.mxu0 0.0
  %509 = vmatpush2.msra.mxu0 0.0
  %510 = vmatprep.subr.mxu0 0.0
  %511 = vmatpush2.msra.mxu0 0.0
  %512 = vmatprep.subr.mxu0 0.0
  %513 = vmatpush2.msra.mxu0 0.0
  %514 = vmatprep.subr.mxu0 0.0
  %515 = vmatpush2.msra.mxu0 0.0
  %516 = vmatprep.subr.mxu0 0.0
  %517 = vmatpush2.msra.mxu0 0.0
  %518 = vmatprep.subr.mxu0 0.0
  %519 = vmatpush2.msra.mxu0 0.0
  %520 = vmatprep.subr.mxu0 0.0
  %521 = vmatpush2.msra.mxu0 0.0
  %522 = vmatprep.subr.mxu0 0.0
  %523 = vmatpush2.msra.mxu0 0.0
  %524 = vmatprep.subr.mxu0 0.0
  %525 = vmatpush2.msra.mxu0 0.0
  %526 = vmatprep.subr.mxu0 0.0
  %527 = vmatpush2.msra.mxu0 0.0
  %528 = vmatprep.subr.mxu0 0.0
  %529 = vmatpush2.msra.mxu0 0.0
  %530 = vmatprep.subr.mxu0 0.0
  %531 = vmatpush2.msra.mxu0 0.0
  %532 = vmatprep.mubr.f32.mxu0 0.0
  %v533 = vand.u32 %v32, 4294901760
  %v534 = vsub.f32 %v32, %v533
  %v535 = vand.u32 %v534, 4294901760
  %536 = vmatmul.mubr.f32.gmra.mxu0 %v535
  %v537 = vpop.f32.mrf.mxu0
  %v538 = vadd.f32 %v428, %v537
  %v539 = vpop.f32.mrf.mxu0
  %540 = vmatprep.mubr.f32.mxu0 0.0
  %v541 = vand.u32 %v33, 4294901760
  %v542 = vsub.f32 %v33, %v541
  %v543 = vand.u32 %v542, 4294901760
  %544 = vmatmul.mubr.f32.gmra.mxu0 %v543
  %v545 = vpop.f32.mrf.mxu0
  %v546 = vadd.f32 %v435, %v545
  %v547 = vpop.f32.mrf.mxu0
  %548 = vmatprep.mubr.f32.mxu0 0.0
  %v549 = vand.u32 %v34, 4294901760
  %v550 = vsub.f32 %v34, %v549
  %v551 = vand.u32 %v550, 4294901760
  %552 = vmatmul.mubr.f32.gmra.mxu0 %v551
  %v553 = vpop.f32.mrf.mxu0
  %v554 = vadd.f32 %v442, %v553
  %v555 = vpop.f32.mrf.mxu0
  %556 = vmatprep.mubr.f32.mxu0 0.0
  %v557 = vand.u32 %v35, 4294901760
  %v558 = vsub.f32 %v35, %v557
  %v559 = vand.u32 %v558, 4294901760
  %560 = vmatmul.mubr.f32.gmra.mxu0 %v559
  %v561 = vpop.f32.mrf.mxu0
  %v562 = vadd.f32 %v449, %v561
  %v563 = vpop.f32.mrf.mxu0
  %564 = vdwg.mxu0
  %565 = vmatprep.subr.mxu0 0.0
  %v566 = vand.u32 %v30, 4294901760
  %v567 = vsub.f32 %v30, %v566
  %v568 = vand.u32 %v567, 4294901760
  %569 = vmatpush1.msra.mxu0 %v568
  %570 = vmatprep.subr.mxu0 0.0
  %v571 = vand.u32 %v29, 4294901760
  %v572 = vsub.f32 %v29, %v571
  %v573 = vand.u32 %v572, 4294901760
  %574 = vmatpush1.msra.mxu0 %v573
  %575 = vmatprep.subr.mxu0 0.0
  %v576 = vand.u32 %v28, 4294901760
  %v577 = vsub.f32 %v28, %v576
  %v578 = vand.u32 %v577, 4294901760
  %579 = vmatpush1.msra.mxu0 %v578
  %580 = vmatprep.subr.mxu0 0.0
  %v581 = vand.u32 %v27, 4294901760
  %v582 = vsub.f32 %v27, %v581
  %v583 = vand.u32 %v582, 4294901760
  %584 = vmatpush1.msra.mxu0 %v583
  %585 = vmatprep.subr.mxu0 0.0
  %v586 = vand.u32 %v26, 4294901760
  %v587 = vsub.f32 %v26, %v586
  %v588 = vand.u32 %v587, 4294901760
  %589 = vmatpush1.msra.mxu0 %v588
  %590 = vmatprep.subr.mxu0 0.0
  %v591 = vand.u32 %v25, 4294901760
  %v592 = vsub.f32 %v25, %v591
  %v593 = vand.u32 %v592, 4294901760
  %594 = vmatpush1.msra.mxu0 %v593
  %595 = vmatprep.subr.mxu0 0.0
  %v596 = vand.u32 %v24, 4294901760
  %v597 = vsub.f32 %v24, %v596
  %v598 = vand.u32 %v597, 4294901760
  %599 = vmatpush1.msra.mxu0 %v598
  %600 = vmatprep.subr.mxu0 0.0
  %v601 = vand.u32 %v23, 4294901760
  %v602 = vsub.f32 %v23, %v601
  %v603 = vand.u32 %v602, 4294901760
  %604 = vmatpush1.msra.mxu0 %v603
  %605 = vmatprep.subr.mxu0 0.0
  %v606 = vand.u32 %v22, 4294901760
  %v607 = vsub.f32 %v22, %v606
  %v608 = vand.u32 %v607, 4294901760
  %609 = vmatpush1.msra.mxu0 %v608
  %610 = vmatprep.subr.mxu0 0.0
  %v611 = vand.u32 %v21, 4294901760
  %v612 = vsub.f32 %v21, %v611
  %v613 = vand.u32 %v612, 4294901760
  %614 = vmatpush1.msra.mxu0 %v613
  %615 = vmatprep.subr.mxu0 0.0
  %v616 = vand.u32 %v20, 4294901760
  %v617 = vsub.f32 %v20, %v616
  %v618 = vand.u32 %v617, 4294901760
  %619 = vmatpush1.msra.mxu0 %v618
  %620 = vmatprep.subr.mxu0 0.0
  %v621 = vand.u32 %v19, 4294901760
  %v622 = vsub.f32 %v19, %v621
  %v623 = vand.u32 %v622, 4294901760
  %624 = vmatpush1.msra.mxu0 %v623
  %625 = vmatprep.subr.mxu0 0.0
  %v626 = vand.u32 %v18, 4294901760
  %v627 = vsub.f32 %v18, %v626
  %v628 = vand.u32 %v627, 4294901760
  %629 = vmatpush1.msra.mxu0 %v628
  %630 = vmatprep.subr.mxu0 0.0
  %v631 = vand.u32 %v17, 4294901760
  %v632 = vsub.f32 %v17, %v631
  %v633 = vand.u32 %v632, 4294901760
  %634 = vmatpush1.msra.mxu0 %v633
  %635 = vmatprep.subr.mxu0 0.0
  %v636 = vand.u32 %v16, 4294901760
  %v637 = vsub.f32 %v16, %v636
  %v638 = vand.u32 %v637, 4294901760
  %639 = vmatpush1.msra.mxu0 %v638
  %640 = vmatprep.subr.mxu0 0.0
  %v641 = vand.u32 %v15, 4294901760
  %v642 = vsub.f32 %v15, %v641
  %v643 = vand.u32 %v642, 4294901760
  %644 = vmatpush1.msra.mxu0 %v643
  %645 = vmatprep.subr.mxu0 0.0
  %646 = vmatpush2.msra.mxu0 0.0
  %647 = vmatprep.subr.mxu0 0.0
  %648 = vmatpush2.msra.mxu0 0.0
  %649 = vmatprep.subr.mxu0 0.0
  %650 = vmatpush2.msra.mxu0 0.0
  %651 = vmatprep.subr.mxu0 0.0
  %652 = vmatpush2.msra.mxu0 0.0
  %653 = vmatprep.subr.mxu0 0.0
  %654 = vmatpush2.msra.mxu0 0.0
  %655 = vmatprep.subr.mxu0 0.0
  %656 = vmatpush2.msra.mxu0 0.0
  %657 = vmatprep.subr.mxu0 0.0
  %658 = vmatpush2.msra.mxu0 0.0
  %659 = vmatprep.subr.mxu0 0.0
  %660 = vmatpush2.msra.mxu0 0.0
  %661 = vmatprep.subr.mxu0 0.0
  %662 = vmatpush2.msra.mxu0 0.0
  %663 = vmatprep.subr.mxu0 0.0
  %664 = vmatpush2.msra.mxu0 0.0
  %665 = vmatprep.subr.mxu0 0.0
  %666 = vmatpush2.msra.mxu0 0.0
  %667 = vmatprep.subr.mxu0 0.0
  %668 = vmatpush2.msra.mxu0 0.0
  %669 = vmatprep.subr.mxu0 0.0
  %670 = vmatpush2.msra.mxu0 0.0
  %671 = vmatprep.subr.mxu0 0.0
  %672 = vmatpush2.msra.mxu0 0.0
  %673 = vmatprep.subr.mxu0 0.0
  %674 = vmatpush2.msra.mxu0 0.0
  %675 = vmatprep.subr.mxu0 0.0
  %676 = vmatpush2.msra.mxu0 0.0
  %677 = vmatprep.mubr.f32.mxu0 0.0
  %v678 = vand.u32 %v32, 4294901760
  %679 = vmatmul.mubr.f32.gmra.mxu0 %v678
  %v680 = vpop.f32.mrf.mxu0
  %v681 = vadd.f32 %v538, %v680
  %v682 = vpop.f32.mrf.mxu0
  %683 = vmatprep.mubr.f32.mxu0 0.0
  %v684 = vand.u32 %v33, 4294901760
  %685 = vmatmul.mubr.f32.gmra.mxu0 %v684
  %v686 = vpop.f32.mrf.mxu0
  %v687 = vadd.f32 %v546, %v686
  %v688 = vpop.f32.mrf.mxu0
  %689 = vmatprep.mubr.f32.mxu0 0.0
  %v690 = vand.u32 %v34, 4294901760
  %691 = vmatmul.mubr.f32.gmra.mxu0 %v690
  %v692 = vpop.f32.mrf.mxu0
  %v693 = vadd.f32 %v554, %v692
  %v694 = vpop.f32.mrf.mxu0
  %695 = vmatprep.mubr.f32.mxu0 0.0
  %v696 = vand.u32 %v35, 4294901760
  %697 = vmatmul.mubr.f32.gmra.mxu0 %v696
  %v698 = vpop.f32.mrf.mxu0
  %v699 = vadd.f32 %v562, %v698
  %v700 = vpop.f32.mrf.mxu0
  %701 = vdwg.mxu0
  %702 = vmatprep.subr.mxu0 0.0
  %v703 = vand.u32 %v30, 4294901760
  %704 = vmatpush1.msra.mxu0 %v703
  %705 = vmatprep.subr.mxu0 0.0
  %v706 = vand.u32 %v29, 4294901760
  %707 = vmatpush1.msra.mxu0 %v706
  %708 = vmatprep.subr.mxu0 0.0
  %v709 = vand.u32 %v28, 4294901760
  %710 = vmatpush1.msra.mxu0 %v709
  %711 = vmatprep.subr.mxu0 0.0
  %v712 = vand.u32 %v27, 4294901760
  %713 = vmatpush1.msra.mxu0 %v712
  %714 = vmatprep.subr.mxu0 0.0
  %v715 = vand.u32 %v26, 4294901760
  %716 = vmatpush1.msra.mxu0 %v715
  %717 = vmatprep.subr.mxu0 0.0
  %v718 = vand.u32 %v25, 4294901760
  %719 = vmatpush1.msra.mxu0 %v718
  %720 = vmatprep.subr.mxu0 0.0
  %v721 = vand.u32 %v24, 4294901760
  %722 = vmatpush1.msra.mxu0 %v721
  %723 = vmatprep.subr.mxu0 0.0
  %v724 = vand.u32 %v23, 4294901760
  %725 = vmatpush1.msra.mxu0 %v724
  %726 = vmatprep.subr.mxu0 0.0
  %v727 = vand.u32 %v22, 4294901760
  %728 = vmatpush1.msra.mxu0 %v727
  %729 = vmatprep.subr.mxu0 0.0
  %v730 = vand.u32 %v21, 4294901760
  %731 = vmatpush1.msra.mxu0 %v730
  %732 = vmatprep.subr.mxu0 0.0
  %v733 = vand.u32 %v20, 4294901760
  %734 = vmatpush1.msra.mxu0 %v733
  %735 = vmatprep.subr.mxu0 0.0
  %v736 = vand.u32 %v19, 4294901760
  %737 = vmatpush1.msra.mxu0 %v736
  %738 = vmatprep.subr.mxu0 0.0
  %v739 = vand.u32 %v18, 4294901760
  %740 = vmatpush1.msra.mxu0 %v739
  %741 = vmatprep.subr.mxu0 0.0
  %v742 = vand.u32 %v17, 4294901760
  %743 = vmatpush1.msra.mxu0 %v742
  %744 = vmatprep.subr.mxu0 0.0
  %v745 = vand.u32 %v16, 4294901760
  %746 = vmatpush1.msra.mxu0 %v745
  %747 = vmatprep.subr.mxu0 0.0
  %v748 = vand.u32 %v15, 4294901760
  %749 = vmatpush1.msra.mxu0 %v748
  %750 = vmatprep.subr.mxu0 0.0
  %751 = vmatpush2.msra.mxu0 0.0
  %752 = vmatprep.subr.mxu0 0.0
  %753 = vmatpush2.msra.mxu0 0.0
  %754 = vmatprep.subr.mxu0 0.0
  %755 = vmatpush2.msra.mxu0 0.0
  %756 = vmatprep.subr.mxu0 0.0
  %757 = vmatpush2.msra.mxu0 0.0
  %758 = vmatprep.subr.mxu0 0.0
  %759 = vmatpush2.msra.mxu0 0.0
  %760 = vmatprep.subr.mxu0 0.0
  %761 = vmatpush2.msra.mxu0 0.0
  %762 = vmatprep.subr.mxu0 0.0
  %763 = vmatpush2.msra.mxu0 0.0
  %764 = vmatprep.subr.mxu0 0.0
  %765 = vmatpush2.msra.mxu0 0.0
  %766 = vmatprep.subr.mxu0 0.0
  %767 = vmatpush2.msra.mxu0 0.0
  %768 = vmatprep.subr.mxu0 0.0
  %769 = vmatpush2.msra.mxu0 0.0
  %770 = vmatprep.subr.mxu0 0.0
  %771 = vmatpush2.msra.mxu0 0.0
  %772 = vmatprep.subr.mxu0 0.0
  %773 = vmatpush2.msra.mxu0 0.0
  %774 = vmatprep.subr.mxu0 0.0
  %775 = vmatpush2.msra.mxu0 0.0
  %776 = vmatprep.subr.mxu0 0.0
  %777 = vmatpush2.msra.mxu0 0.0
  %778 = vmatprep.subr.mxu0 0.0
  %779 = vmatpush2.msra.mxu0 0.0
  %780 = vmatprep.subr.mxu0 0.0
  %781 = vmatpush2.msra.mxu0 0.0
  %782 = vmatprep.mubr.f32.mxu0 0.0
  %v783 = vand.u32 %v32, 4294901760
  %784 = vmatmul.mubr.f32.gmra.mxu0 %v783
  %v785 = vpop.f32.mrf.mxu0
  %v786 = vadd.f32 %v681, %v785
  %v787 = vpop.f32.mrf.mxu0
  %788 = vmatprep.mubr.f32.mxu0 0.0
  %v789 = vand.u32 %v33, 4294901760
  %790 = vmatmul.mubr.f32.gmra.mxu0 %v789
  %v791 = vpop.f32.mrf.mxu0
  %v792 = vadd.f32 %v687, %v791
  %v793 = vpop.f32.mrf.mxu0
  %794 = vmatprep.mubr.f32.mxu0 0.0
  %v795 = vand.u32 %v34, 4294901760
  %796 = vmatmul.mubr.f32.gmra.mxu0 %v795
  %v797 = vpop.f32.mrf.mxu0
  %v798 = vadd.f32 %v693, %v797
  %v799 = vpop.f32.mrf.mxu0
  %800 = vmatprep.mubr.f32.mxu0 0.0
  %v801 = vand.u32 %v35, 4294901760
  %802 = vmatmul.mubr.f32.gmra.mxu0 %v801
  %v803 = vpop.f32.mrf.mxu0
  %v804 = vadd.f32 %v699, %v803
  %v805 = vpop.f32.mrf.mxu0
  %806 = vdwg.mxu0
  %v807 = vmax.f32 %v786, 0.0
  %v808 = vmax.f32 %v792, 0.0
  %v809 = vmax.f32 %v798, 0.0
  %v810 = vmax.f32 %v804, 0.0
  %vm811 = vcmask 31744
  %812 = vst.msk [vmem:[%s3] sm:$0xff] %vm811, %v807
  %813 = vst.msk [vmem:[%s3 + $0x8] sm:$0xff] %vm811, %v808
  %814 = vst.msk [vmem:[%s3 + $0x10] sm:$0xff] %vm811, %v809
  %815 = vst.msk [vmem:[%s3 + $0x18] sm:$0xff] %vm811, %v810
  // Predicated region
  $region14: #{baseline_head_pallas.1} parent=0 // pred_check
    _
  $region15: #{baseline_head_pallas.1} parent=0 // pred_check_branch
    %817 = sbr.rel (0) target = $region17
  $region16: #{baseline_head_pallas.1} parent=0 // pred_region
    _
  $region17: #{baseline_head_pallas.1} parent=0 // pred_fallthru
    _
  // Predicated region
  $region18: #{baseline_head_pallas.1} parent=0 // pred_check
    _
  $region19: #{baseline_head_pallas.1} parent=0 // pred_check_branch
    %819 = sbr.rel (0) target = $region21
  $region20: #{baseline_head_pallas.1} parent=0 // pred_region
    _
  $region21: #{baseline_head_pallas.1} parent=0 // pred_fallthru
    _

</llo_original>
